<compile_context>
chip_gen: v5e
topology: v5e:2x2
jax: 0.10.0
libtpu: 0.0.40
codegen_flags: <defaults>
</compile_context>

<pallas_src>
import functools

import jax
import jax.numpy as jnp
from jax.experimental import pallas as pl
from jax.experimental.pallas import tpu as pltpu


def _round_up(x, m):
    return ((x + m - 1) // m) * m


# ---------------------------------------------------------------------------
# Fused kernel: conv3x3 + ReLU + global-avg-pool + head∘L1 + ReLU
# One batch block (B samples) per grid step.
# ---------------------------------------------------------------------------
def _backbone_kernel(x_ref, wflat_ref, convb_ref, mcomb_ref, bfused_ref,
                     out_ref, *, H):
    # x_ref:      [B*H, Kp]    bf16  im2row conv LHS (K = 3*Wp*Cin, zero-padded to Kp)
    # wflat_ref:  [Kp, W*Cout] bf16  flattened 3x3 conv weights (banded along K)
    # convb_ref:  [1, W*Cout]  f32   conv bias tiled per output column
    # mcomb_ref:  [W*Cout, Df] f32   pool_fold @ head_w @ l1_w  (1/(H*W) folded in)
    # bfused_ref: [1, Df]      f32   head_b @ l1_w + l1_b
    # out_ref:    [B, Df]      f32
    BH = x_ref.shape[0]
    WCo = wflat_ref.shape[1]
    B = BH // H

    # -- body: 3x3 "same" conv as ONE aligned MXU matmul (M = B*H), f32 acc --
    acc = jnp.dot(x_ref[...], wflat_ref[...],
                  preferred_element_type=jnp.float32)          # [B*H, W*Cout]
    y = jnp.maximum(acc + convb_ref[...], 0.0)                 # bias + ReLU (f32)

    # -- pool: per-sample sum over H rows (tile-aligned reshape, sublane reduce);
    #    the W-fold and the 1/(H*W) scale live inside mcomb --
    sums = jnp.sum(y.reshape(B, H, WCo), axis=1)               # [B, W*Cout]

    # -- head ∘ L1 (fused at prep time) + bias + ReLU, all f32 --
    out = jnp.dot(sums, mcomb_ref[...],
                  preferred_element_type=jnp.float32) + bfused_ref[...]  # [B, Df]
    out_ref[...] = jnp.maximum(out, 0.0)


# ---------------------------------------------------------------------------
# One-time param lowering (PyTorch layouts -> kernel-friendly layouts)
# ---------------------------------------------------------------------------
def prepare_params(params, H, W, lane_pad=128):
    conv_w = params["conv_w"]                      # [Cout, Cin, 3, 3]
    Cout, Cin, KH, KW = conv_w.shape
    Wp = W + KW - 1                                # padded width (pad=1 each side)
    K = KH * Wp * Cin
    Kp = _round_up(K, lane_pad)

    # wflat[i*Wp*Cin + wp*Cin + c, w*Cout + o] = conv_w[o, c, i, wp - w] for 0<=wp-w<KW
    wflat = jnp.zeros((KH, Wp, Cin, W, Cout), jnp.float32)
    for i in range(KH):
        for j in range(KW):
            diag = jnp.zeros((Wp, W), jnp.float32)
            diag = diag.at[jnp.arange(W) + j, jnp.arange(W)].set(1.0)
            wflat = wflat.at[i].add(
                jnp.einsum("pq,co->pcqo", diag, conv_w[:, :, i, j].T))
    wflat = wflat.reshape(K, W * Cout)
    wflat = jnp.pad(wflat, ((0, Kp - K), (0, 0)))              # zero K padding rows

    conv_b_tiled = jnp.tile(params["conv_b"], (W,)).reshape(1, W * Cout)

    # head ∘ L1 fused in f32; global-avg-pool fold (and 1/(H*W)) folded in too.
    w_fused = params["head_w"].astype(jnp.float32) @ params["l1_w"].astype(jnp.float32)
    b_fused = (params["head_b"].astype(jnp.float32) @ params["l1_w"].astype(jnp.float32)
               + params["l1_b"].astype(jnp.float32)).reshape(1, -1)
    pool_mat = jnp.tile(jnp.eye(Cout, dtype=jnp.float32), (W, 1)) / float(H * W)
    m_comb = pool_mat @ w_fused                                # [W*Cout, Df]

    return {
        "wflat": wflat.astype(jnp.bfloat16),                   # [Kp, W*Cout]
        "conv_b": conv_b_tiled.astype(jnp.float32),            # [1, W*Cout]
        "m_comb": m_comb.astype(jnp.float32),                  # [W*Cout, Df]
        "b_fused": b_fused.astype(jnp.float32),                # [1, Df]
    }


# ---------------------------------------------------------------------------
# Full BackBone forward (single pallas_call, batch-blocked grid)
# ---------------------------------------------------------------------------
def backbone_forward(x_nchw, prep, block_b=128):
    # block_b: samples per grid step; 128 fills the v5e MXU, use 256 on v6e/v7x.
    N, Cin, H, W = x_nchw.shape
    KH = KW = 3
    Hp, Wp = H + KH - 1, W + KW - 1
    K = KH * Wp * Cin
    Kp, WCo = prep["wflat"].shape
    Df = prep["m_comb"].shape[1]

    B = min(block_b, _round_up(N, 8))              # multiple of 8 samples / step
    Npad = _round_up(N, B)
    nb = Npad // B

    # Layout glue (XLA side): pad -> NHWC -> stack the 3 H-shifted padded-row
    # views along K (im2row over H only) -> lane-pad K -> bf16.
    xp = jnp.pad(x_nchw, ((0, Npad - N), (0, 0), (1, 1), (1, 1)))
    xp = jnp.transpose(xp, (0, 2, 3, 1))                              # [Npad, Hp, Wp, Cin]
    rows = jnp.stack([xp[:, i:i + H] for i in range(KH)], axis=2)     # [Npad, H, 3, Wp, Cin]
    L = rows.reshape(Npad, H, K)
    L = jnp.pad(L, ((0, 0), (0, 0), (0, Kp - K)))
    L = L.reshape(Npad * H, Kp).astype(jnp.bfloat16)

    flops = 2 * Npad * H * Kp * WCo + 2 * Npad * WCo * Df
    bytes_accessed = (L.size * 2 + prep["wflat"].size * 2
                      + prep["conv_b"].size * 4 + prep["m_comb"].size * 4
                      + prep["b_fused"].size * 4 + Npad * Df * 4)
    vmem_limit = min(128 * 1024 * 1024, max(16 * 1024 * 1024, 8 * B * H * WCo * 4))

    kernel = functools.partial(_backbone_kernel, H=H)

    out = pl.pallas_call(
        kernel,
        out_shape=jax.ShapeDtypeStruct((Npad, Df), jnp.float32),
        grid=(nb,),
        in_specs=[
            pl.BlockSpec((B * H, Kp), lambda n: (n, 0)),   # per-block im2row LHS (bf16)
            pl.BlockSpec((Kp, WCo), lambda n: (0, 0)),     # conv weights (bf16, fetched once)
            pl.BlockSpec((1, WCo), lambda n: (0, 0)),      # conv bias (tiled)
            pl.BlockSpec((WCo, Df), lambda n: (0, 0)),     # pool∘head∘L1 fused matrix (f32)
            pl.BlockSpec((1, Df), lambda n: (0, 0)),       # fused bias (f32)
        ],
        out_specs=pl.BlockSpec((B, Df), lambda n: (n, 0)),
        compiler_params=pltpu.CompilerParams(
            dimension_semantics=("parallel",),
            vmem_limit_bytes=vmem_limit),
        cost_estimate=pl.CostEstimate(flops=flops, transcendentals=0,
                                      bytes_accessed=bytes_accessed),
    )(L, prep["wflat"], prep["conv_b"], prep["m_comb"], prep["b_fused"])
    return out[:N]


# ---------------------------------------------------------------------------
# Param init (PyTorch-layout, f32) and pure-JAX reference
# ---------------------------------------------------------------------------
def init_params(key, cin=4, cbody=16, head_out=4096, feature_dim=32):
    ks = jax.random.split(key, 6)
    s = lambda fan_in: 1.0 / jnp.sqrt(fan_in)
    return {
        "conv_w": jax.random.normal(ks[0], (cbody, cin, 3, 3), jnp.float32) * s(cin * 9),
        "conv_b": jax.random.normal(ks[1], (cbody,), jnp.float32) * 0.01,
        "head_w": jax.random.normal(ks[2], (cbody, head_out), jnp.float32) * s(cbody),
        "head_b": jax.random.normal(ks[3], (head_out,), jnp.float32) * 0.01,
        "l1_w": jax.random.normal(ks[4], (head_out, feature_dim), jnp.float32) * s(head_out),
        "l1_b": jax.random.normal(ks[5], (feature_dim,), jnp.float32) * 0.01,
    }


def backbone_reference(x_nchw, params):
    y = jax.lax.conv_general_dilated(
        x_nchw, params["conv_w"], window_strides=(1, 1), padding="SAME",
        dimension_numbers=("NCHW", "OIHW", "NCHW"))
    y = jnp.maximum(y + params["conv_b"][None, :, None, None], 0.0)    # body
    y = jnp.mean(y, axis=(2, 3))                                       # pool + flatten
    y = y @ params["head_w"] + params["head_b"]                        # head
    y = jnp.maximum(y @ params["l1_w"] + params["l1_b"], 0.0)          # relu(L1)
    return y


if __name__ == "__main__":
    key = jax.random.PRNGKey(0)
    k_x, k_p = jax.random.split(key)
    x = jax.random.normal(k_x, (2, 4, 16, 16), jnp.float32)            # NCHW input
    params = init_params(k_p)
    prep = prepare_params(params, H=16, W=16)

    fwd = jax.jit(backbone_forward)
    out = jax.block_until_ready(fwd(x, prep))
    assert out.shape == (2, 32), out.shape

    ref = jax.block_until_ready(backbone_reference(x, params))
    # Conv LHS/weights go through the MXU in bf16 (f32 accumulation) -> loosened
    # tolerance vs the f32 reference; the head/L1 path is now exact f32.
    err = float(jnp.max(jnp.abs(out - ref)))
    assert jnp.allclose(out, ref, atol=5e-2, rtol=5e-2), err

    print("KERNEL_OK")
</pallas_src>

<mosaic_0001>
module attributes {stable_mosaic.version = 11 : i64} {
  func.func @_backbone_kernel(%arg0: i32, %arg1: memref<128x256xbf16, #tpu.memory_space<vmem>>, %arg2: memref<256x256xbf16, #tpu.memory_space<vmem>>, %arg3: memref<1x256xf32, #tpu.memory_space<vmem>>, %arg4: memref<256x32xf32, #tpu.memory_space<vmem>>, %arg5: memref<1x32xf32, #tpu.memory_space<vmem>>, %arg6: memref<8x32xf32, #tpu.memory_space<vmem>>) attributes {dimension_semantics = [#tpu.dimension_semantics<parallel>], iteration_bounds = array<i64: 1>, scalar_prefetch = 0 : i64, scratch_operands = 0 : i64, tpu.core_type = #tpu.core_type<tc>, window_params = [{transform_indices = @transform_0, window_bounds = array<i64: 128, 256>}, {pipeline_mode = #tpu.pipeline_mode<synchronous>, transform_indices = @transform_1, window_bounds = array<i64: 256, 256>}, {pipeline_mode = #tpu.pipeline_mode<synchronous>, transform_indices = @transform_2, window_bounds = array<i64: 1, 256>}, {pipeline_mode = #tpu.pipeline_mode<synchronous>, transform_indices = @transform_3, window_bounds = array<i64: 256, 32>}, {pipeline_mode = #tpu.pipeline_mode<synchronous>, transform_indices = @transform_4, window_bounds = array<i64: 1, 32>}, {transform_indices = @transform_5, window_bounds = array<i64: 8, 32>}]} {
    %c0 = arith.constant 0 : index
    %c0_0 = arith.constant 0 : index
    %0 = vector.load %arg1[%c0, %c0_0] : memref<128x256xbf16, #tpu.memory_space<vmem>>, vector<128x256xbf16>
    %c0_1 = arith.constant 0 : index
    %c0_2 = arith.constant 0 : index
    %1 = vector.load %arg2[%c0_1, %c0_2] : memref<256x256xbf16, #tpu.memory_space<vmem>>, vector<256x256xbf16>
    %cst = arith.constant dense<0.000000e+00> : vector<128x256xf32>
    %2 = tpu.matmul %0, %1, %cst {dimension_numbers = #tpu.dot_dimension_numbers<[1], [0], [0], [1], [0, 0, 1, 1], [], []>} : vector<128x256xbf16>, vector<256x256xbf16>, vector<128x256xf32> -> vector<128x256xf32>
    %c0_3 = arith.constant 0 : index
    %c0_4 = arith.constant 0 : index
    %3 = vector.load %arg3[%c0_3, %c0_4] : memref<1x256xf32, #tpu.memory_space<vmem>>, vector<1x256xf32>
    %4 = vector.broadcast %3 : vector<1x256xf32> to vector<128x256xf32>
    %5 = arith.addf %2, %4 : vector<128x256xf32>
    %cst_5 = arith.constant 0.000000e+00 : f32
    %6 = vector.broadcast %cst_5 : f32 to vector<128x256xf32>
    %7 = arith.maximumf %5, %6 : vector<128x256xf32>
    %8 = vector.shape_cast %7 : vector<128x256xf32> to vector<8x16x256xf32>
    %cst_6 = arith.constant dense<0.000000e+00> : vector<8x256xf32>
    %9 = vector.multi_reduction <add>, %8, %cst_6 [1] : vector<8x16x256xf32> to vector<8x256xf32>
    %c0_7 = arith.constant 0 : index
    %c0_8 = arith.constant 0 : index
    %10 = vector.load %arg4[%c0_7, %c0_8] : memref<256x32xf32, #tpu.memory_space<vmem>>, vector<256x32xf32>
    %cst_9 = arith.constant dense<0.000000e+00> : vector<8x32xf32>
    %11 = tpu.matmul %9, %10, %cst_9 {dimension_numbers = #tpu.dot_dimension_numbers<[1], [0], [0], [1], [0, 0, 1, 1], [], []>} : vector<8x256xf32>, vector<256x32xf32>, vector<8x32xf32> -> vector<8x32xf32>
    %c0_10 = arith.constant 0 : index
    %c0_11 = arith.constant 0 : index
    %12 = vector.load %arg5[%c0_10, %c0_11] : memref<1x32xf32, #tpu.memory_space<vmem>>, vector<1x32xf32>
    %13 = vector.broadcast %12 : vector<1x32xf32> to vector<8x32xf32>
    %14 = arith.addf %11, %13 : vector<8x32xf32>
    %cst_12 = arith.constant 0.000000e+00 : f32
    %15 = vector.broadcast %cst_12 : f32 to vector<8x32xf32>
    %16 = arith.maximumf %14, %15 : vector<8x32xf32>
    %c0_13 = arith.constant 0 : index
    %c0_14 = arith.constant 0 : index
    %17 = vector.load %arg6[%c0_13, %c0_14] : memref<8x32xf32, #tpu.memory_space<vmem>>, vector<8x32xf32>
    tpu.vector_store %arg6[%c0_13, %c0_14], %16 {strides = array<i32>} : memref<8x32xf32, #tpu.memory_space<vmem>>, vector<8x32xf32>,
    return
  }
  func.func @transform_0(%arg0: i32) -> (i32, i32) {
    %c0_i32 = arith.constant 0 : i32
    %c0_i32_0 = arith.constant 0 : i32
    return %arg0, %c0_i32 : i32, i32
  }
  func.func @transform_1(%arg0: i32) -> (i32, i32) {
    %c0_i32 = arith.constant 0 : i32
    %c0_i32_0 = arith.constant 0 : i32
    %c0_i32_1 = arith.constant 0 : i32
    return %c0_i32, %c0_i32_0 : i32, i32
  }
  func.func @transform_2(%arg0: i32) -> (i32, i32) {
    %c0_i32 = arith.constant 0 : i32
    %c0_i32_0 = arith.constant 0 : i32
    %c0_i32_1 = arith.constant 0 : i32
    return %c0_i32, %c0_i32_0 : i32, i32
  }
  func.func @transform_3(%arg0: i32) -> (i32, i32) {
    %c0_i32 = arith.constant 0 : i32
    %c0_i32_0 = arith.constant 0 : i32
    %c0_i32_1 = arith.constant 0 : i32
    return %c0_i32, %c0_i32_0 : i32, i32
  }
  func.func @transform_4(%arg0: i32) -> (i32, i32) {
    %c0_i32 = arith.constant 0 : i32
    %c0_i32_0 = arith.constant 0 : i32
    %c0_i32_1 = arith.constant 0 : i32
    return %c0_i32, %c0_i32_0 : i32, i32
  }
  func.func @transform_5(%arg0: i32) -> (i32, i32) {
    %c0_i32 = arith.constant 0 : i32
    %c0_i32_0 = arith.constant 0 : i32
    return %arg0, %c0_i32 : i32, i32
  }
}

</mosaic_0001>

<llo_original>
// kernel: backbone_forward.1
$region0: #{backbone_forward.1}
  #allocation0 [shape = 'u32[]', space=smem, size = 0x4, offset = 0x4, fixed_abs, tag = 'smem constant byte address 0x4 - core index']
  #allocation1 [shape = 'u32[72,128]{1,0:T(1,128)}', space=vmem, size = 0x9000, scoped, tag = 'internal scratch']
  %s0 = inlined_call_operand.vmem [shape: bf16[128,256], index: 0, kind: input, shape index: {}]
  %s1 = inlined_call_operand.vmem [shape: bf16[256,256], index: 1, kind: input, shape index: {}]
  %s2 = inlined_call_operand.vmem [shape: f32[1,256], index: 2, kind: input, shape index: {}]
  %s3 = inlined_call_operand.vmem [shape: f32[256,32], index: 3, kind: input, shape index: {}]
  %s4 = inlined_call_operand.vmem [shape: f32[1,32], index: 4, kind: input, shape index: {}]
  %s5 = inlined_call_operand.vmem [shape: f32[8,32], index: 5, kind: output, shape index: {}]
  %s6 = sld [smem:[#allocation0]]
  $region30: #{backbone_forward.1} parent=0
    _
  %s8 = ssub.s32 1, %s6
  %s9 = scalar_select 0, %s8, %s6
  // Predicated region
  $region2: #{backbone_forward.1} parent=0 // pred_check
    _
  $region3: #{backbone_forward.1} parent=0 // pred_check_branch
    %11 = sbr.rel (0) target = $region5
  $region4: #{backbone_forward.1} parent=0 // pred_region
    _
  $region5: #{backbone_forward.1} parent=0 // pred_fallthru
    _
  // Predicated region
  $region6: #{backbone_forward.1} parent=0 // pred_check
    _
  $region7: #{backbone_forward.1} parent=0 // pred_check_branch
    %13 = sbr.rel (0) target = $region9
  $region8: #{backbone_forward.1} parent=0 // pred_region
    _
  $region9: #{backbone_forward.1} parent=0 // pred_fallthru
    _
  // Predicated region
  $region10: #{backbone_forward.1} parent=0 // pred_check
    _
  $region11: #{backbone_forward.1} parent=0 // pred_check_branch
    %15 = sbr.rel (0) target = $region13
  $region12: #{backbone_forward.1} parent=0 // pred_region
    _
  $region13: #{backbone_forward.1} parent=0 // pred_fallthru
    _
  // Predicated region
  $region14: #{backbone_forward.1} parent=0 // pred_check
    _
  $region15: #{backbone_forward.1} parent=0 // pred_check_branch
    %17 = sbr.rel (0) target = $region17
  $region16: #{backbone_forward.1} parent=0 // pred_region
    _
  $region17: #{backbone_forward.1} parent=0 // pred_fallthru
    _
  // Predicated region
  $region18: #{backbone_forward.1} parent=0 // pred_check
    _
  $region19: #{backbone_forward.1} parent=0 // pred_check_branch
    %19 = sbr.rel (0) target = $region21
  $region20: #{backbone_forward.1} parent=0 // pred_region
    _
  $region21: #{backbone_forward.1} parent=0 // pred_fallthru
    _
  %v20 = vld [vmem:[%s0] sm:$0xff]
  %v21 = vld [vmem:[%s0 + $0x8] sm:$0xff]
  %v22 = vld [vmem:[%s0 + $0x10] sm:$0xff]
  %v23 = vld [vmem:[%s0 + $0x18] sm:$0xff]
  %v24 = vld [vmem:[%s0 + $0x20] sm:$0xff]
  %v25 = vld [vmem:[%s0 + $0x28] sm:$0xff]
  %v26 = vld [vmem:[%s0 + $0x30] sm:$0xff]
  %v27 = vld [vmem:[%s0 + $0x38] sm:$0xff]
  %v28 = vld [vmem:[%s0 + $0x40] sm:$0xff]
  %v29 = vld [vmem:[%s0 + $0x48] sm:$0xff]
  %v30 = vld [vmem:[%s0 + $0x50] sm:$0xff]
  %v31 = vld [vmem:[%s0 + $0x58] sm:$0xff]
  %v32 = vld [vmem:[%s0 + $0x60] sm:$0xff]
  %v33 = vld [vmem:[%s0 + $0x68] sm:$0xff]
  %v34 = vld [vmem:[%s0 + $0x70] sm:$0xff]
  %v35 = vld [vmem:[%s0 + $0x78] sm:$0xff]
  %v36 = vld [vmem:[%s1] sm:$0xff]
  %v37 = vld [vmem:[%s1 + $0x8] sm:$0xff]
  %v38 = vld [vmem:[%s1 + $0x10] sm:$0xff]
  %v39 = vld [vmem:[%s1 + $0x18] sm:$0xff]
  %v40 = vld [vmem:[%s1 + $0x20] sm:$0xff]
  %v41 = vld [vmem:[%s1 + $0x28] sm:$0xff]
  %v42 = vld [vmem:[%s1 + $0x30] sm:$0xff]
  %v43 = vld [vmem:[%s1 + $0x38] sm:$0xff]
  %v44 = vld [vmem:[%s1 + $0x40] sm:$0xff]
  %v45 = vld [vmem:[%s1 + $0x48] sm:$0xff]
  %v46 = vld [vmem:[%s1 + $0x50] sm:$0xff]
  %v47 = vld [vmem:[%s1 + $0x58] sm:$0xff]
  %v48 = vld [vmem:[%s1 + $0x60] sm:$0xff]
  %v49 = vld [vmem:[%s1 + $0x68] sm:$0xff]
  %v50 = vld [vmem:[%s1 + $0x70] sm:$0xff]
  %v51 = vld [vmem:[%s1 + $0x78] sm:$0xff]
  %v52 = vld [vmem:[%s1 + $0x80] sm:$0xff]
  %v53 = vld [vmem:[%s1 + $0x88] sm:$0xff]
  %v54 = vld [vmem:[%s1 + $0x90] sm:$0xff]
  %v55 = vld [vmem:[%s1 + $0x98] sm:$0xff]
  %v56 = vld [vmem:[%s1 + $0xa0] sm:$0xff]
  %v57 = vld [vmem:[%s1 + $0xa8] sm:$0xff]
  %v58 = vld [vmem:[%s1 + $0xb0] sm:$0xff]
  %v59 = vld [vmem:[%s1 + $0xb8] sm:$0xff]
  %v60 = vld [vmem:[%s1 + $0xc0] sm:$0xff]
  %v61 = vld [vmem:[%s1 + $0xc8] sm:$0xff]
  %v62 = vld [vmem:[%s1 + $0xd0] sm:$0xff]
  %v63 = vld [vmem:[%s1 + $0xd8] sm:$0xff]
  %v64 = vld [vmem:[%s1 + $0xe0] sm:$0xff]
  %v65 = vld [vmem:[%s1 + $0xe8] sm:$0xff]
  %v66 = vld [vmem:[%s1 + $0xf0] sm:$0xff]
  %v67 = vld [vmem:[%s1 + $0xf8] sm:$0xff]
  %v68 = vld [vmem:[%s2] sm:$0x3]
  %v70 = vperm.slane %v68, 0
  %v71 = vperm.slane %v68, 1
  %v90 = vunpack.c.l.b16 %v20
  %v91 = vunpack.c.h.b16 %v20
  %v92 = vunpack.c.l.b16 %v21
  %v93 = vunpack.c.h.b16 %v21
  %v94 = vunpack.c.l.b16 %v22
  %v95 = vunpack.c.h.b16 %v22
  %v96 = vunpack.c.l.b16 %v23
  %v97 = vunpack.c.h.b16 %v23
  %v98 = vunpack.c.l.b16 %v24
  %v99 = vunpack.c.h.b16 %v24
  %v100 = vunpack.c.l.b16 %v25
  %v101 = vunpack.c.h.b16 %v25
  %v102 = vunpack.c.l.b16 %v26
  %v103 = vunpack.c.h.b16 %v26
  %v104 = vunpack.c.l.b16 %v27
  %v105 = vunpack.c.h.b16 %v27
  %v106 = vunpack.c.l.b16 %v28
  %v107 = vunpack.c.h.b16 %v28
  %v108 = vunpack.c.l.b16 %v29
  %v109 = vunpack.c.h.b16 %v29
  %v110 = vunpack.c.l.b16 %v30
  %v111 = vunpack.c.h.b16 %v30
  %v112 = vunpack.c.l.b16 %v31
  %v113 = vunpack.c.h.b16 %v31
  %v114 = vunpack.c.l.b16 %v32
  %v115 = vunpack.c.h.b16 %v32
  %v116 = vunpack.c.l.b16 %v33
  %v117 = vunpack.c.h.b16 %v33
  %v118 = vunpack.c.l.b16 %v34
  %v119 = vunpack.c.h.b16 %v34
  %v120 = vunpack.c.l.b16 %v35
  %v121 = vunpack.c.h.b16 %v35
  %v122 = vpack.c.b16 %v92, %v90
  %v123 = vpack.c.b16 %v93, %v91
  %v124 = vpack.c.b16 %v96, %v94
  %v125 = vpack.c.b16 %v97, %v95
  %v126 = vpack.c.b16 %v100, %v98
  %v127 = vpack.c.b16 %v101, %v99
  %v128 = vpack.c.b16 %v104, %v102
  %v129 = vpack.c.b16 %v105, %v103
  %v130 = vpack.c.b16 %v108, %v106
  %v131 = vpack.c.b16 %v109, %v107
  %v132 = vpack.c.b16 %v112, %v110
  %v133 = vpack.c.b16 %v113, %v111
  %v134 = vpack.c.b16 %v116, %v114
  %v135 = vpack.c.b16 %v117, %v115
  %v136 = vpack.c.b16 %v120, %v118
  %v137 = vpack.c.b16 %v121, %v119
  %v186 = vunpack.c.l.b16 %v36
  %v187 = vunpack.c.h.b16 %v36
  %v188 = vunpack.c.l.b16 %v37
  %v189 = vunpack.c.h.b16 %v37
  %v190 = vunpack.c.l.b16 %v38
  %v191 = vunpack.c.h.b16 %v38
  %v192 = vunpack.c.l.b16 %v39
  %v193 = vunpack.c.h.b16 %v39
  %v194 = vunpack.c.l.b16 %v40
  %v195 = vunpack.c.h.b16 %v40
  %v196 = vunpack.c.l.b16 %v41
  %v197 = vunpack.c.h.b16 %v41
  %v198 = vunpack.c.l.b16 %v42
  %v199 = vunpack.c.h.b16 %v42
  %v200 = vunpack.c.l.b16 %v43
  %v201 = vunpack.c.h.b16 %v43
  %v202 = vunpack.c.l.b16 %v44
  %v203 = vunpack.c.h.b16 %v44
  %v204 = vunpack.c.l.b16 %v45
  %v205 = vunpack.c.h.b16 %v45
  %v206 = vunpack.c.l.b16 %v46
  %v207 = vunpack.c.h.b16 %v46
  %v208 = vunpack.c.l.b16 %v47
  %v209 = vunpack.c.h.b16 %v47
  %v210 = vunpack.c.l.b16 %v48
  %v211 = vunpack.c.h.b16 %v48
  %v212 = vunpack.c.l.b16 %v49
  %v213 = vunpack.c.h.b16 %v49
  %v214 = vunpack.c.l.b16 %v50
  %v215 = vunpack.c.h.b16 %v50
  %v216 = vunpack.c.l.b16 %v51
  %v217 = vunpack.c.h.b16 %v51
  %v218 = vunpack.c.l.b16 %v52
  %v219 = vunpack.c.h.b16 %v52
  %v220 = vunpack.c.l.b16 %v53
  %v221 = vunpack.c.h.b16 %v53
  %v222 = vunpack.c.l.b16 %v54
  %v223 = vunpack.c.h.b16 %v54
  %v224 = vunpack.c.l.b16 %v55
  %v225 = vunpack.c.h.b16 %v55
  %v226 = vunpack.c.l.b16 %v56
  %v227 = vunpack.c.h.b16 %v56
  %v228 = vunpack.c.l.b16 %v57
  %v229 = vunpack.c.h.b16 %v57
  %v230 = vunpack.c.l.b16 %v58
  %v231 = vunpack.c.h.b16 %v58
  %v232 = vunpack.c.l.b16 %v59
  %v233 = vunpack.c.h.b16 %v59
  %v234 = vunpack.c.l.b16 %v60
  %v235 = vunpack.c.h.b16 %v60
  %v236 = vunpack.c.l.b16 %v61
  %v237 = vunpack.c.h.b16 %v61
  %v238 = vunpack.c.l.b16 %v62
  %v239 = vunpack.c.h.b16 %v62
  %v240 = vunpack.c.l.b16 %v63
  %v241 = vunpack.c.h.b16 %v63
  %v242 = vunpack.c.l.b16 %v64
  %v243 = vunpack.c.h.b16 %v64
  %v244 = vunpack.c.l.b16 %v65
  %v245 = vunpack.c.h.b16 %v65
  %v246 = vunpack.c.l.b16 %v66
  %v247 = vunpack.c.h.b16 %v66
  %v248 = vunpack.c.l.b16 %v67
  %v249 = vunpack.c.h.b16 %v67
  %v250 = vpack.c.b16 %v188, %v186
  %v251 = vpack.c.b16 %v189, %v187
  %v252 = vpack.c.b16 %v192, %v190
  %v253 = vpack.c.b16 %v193, %v191
  %v254 = vpack.c.b16 %v196, %v194
  %v255 = vpack.c.b16 %v197, %v195
  %v256 = vpack.c.b16 %v200, %v198
  %v257 = vpack.c.b16 %v201, %v199
  %v258 = vpack.c.b16 %v204, %v202
  %v259 = vpack.c.b16 %v205, %v203
  %v260 = vpack.c.b16 %v208, %v206
  %v261 = vpack.c.b16 %v209, %v207
  %v262 = vpack.c.b16 %v212, %v210
  %v263 = vpack.c.b16 %v213, %v211
  %v264 = vpack.c.b16 %v216, %v214
  %v265 = vpack.c.b16 %v217, %v215
  %v266 = vpack.c.b16 %v220, %v218
  %v267 = vpack.c.b16 %v221, %v219
  %v268 = vpack.c.b16 %v224, %v222
  %v269 = vpack.c.b16 %v225, %v223
  %v270 = vpack.c.b16 %v228, %v226
  %v271 = vpack.c.b16 %v229, %v227
  %v272 = vpack.c.b16 %v232, %v230
  %v273 = vpack.c.b16 %v233, %v231
  %v274 = vpack.c.b16 %v236, %v234
  %v275 = vpack.c.b16 %v237, %v235
  %v276 = vpack.c.b16 %v240, %v238
  %v277 = vpack.c.b16 %v241, %v239
  %v278 = vpack.c.b16 %v244, %v242
  %v279 = vpack.c.b16 %v245, %v243
  %v280 = vpack.c.b16 %v248, %v246
  %v281 = vpack.c.b16 %v249, %v247
  %314 = vmatpush.bf16.msra.mxu0 %v264
  %315 = vmatpush.bf16.msra.mxu0 %v262
  %316 = vmatpush.bf16.msra.mxu0 %v260
  %317 = vmatpush.bf16.msra.mxu0 %v258
  %318 = vmatpush.bf16.msra.mxu0 %v256
  %319 = vmatpush.bf16.msra.mxu0 %v254
  %320 = vmatpush.bf16.msra.mxu0 %v252
  %321 = vmatpush.bf16.msra.mxu0 %v250
  %322 = vmatmul.bf16.gmra.mxu0 %v122
  %v323 = vpop.f32.mrf.mxu0
  %v324 = vadd.f32 %v70, %v323
  %v325 = vpop.f32.mrf.mxu0
  %v326 = vadd.f32 %v70, %v325
  %327 = vmatmul.bf16.gmra.mxu0 %v124
  %v328 = vpop.f32.mrf.mxu0
  %v329 = vadd.f32 %v70, %v328
  %v330 = vpop.f32.mrf.mxu0
  %v331 = vadd.f32 %v70, %v330
  %332 = vmatmul.bf16.gmra.mxu0 %v126
  %v333 = vpop.f32.mrf.mxu0
  %v334 = vadd.f32 %v70, %v333
  %v335 = vpop.f32.mrf.mxu0
  %v336 = vadd.f32 %v70, %v335
  %337 = vmatmul.bf16.gmra.mxu0 %v128
  %v338 = vpop.f32.mrf.mxu0
  %v339 = vadd.f32 %v70, %v338
  %v340 = vpop.f32.mrf.mxu0
  %v341 = vadd.f32 %v70, %v340
  %342 = vmatmul.bf16.gmra.mxu0 %v130
  %v343 = vpop.f32.mrf.mxu0
  %v344 = vadd.f32 %v70, %v343
  %v345 = vpop.f32.mrf.mxu0
  %v346 = vadd.f32 %v70, %v345
  %347 = vmatmul.bf16.gmra.mxu0 %v132
  %v348 = vpop.f32.mrf.mxu0
  %v349 = vadd.f32 %v70, %v348
  %v350 = vpop.f32.mrf.mxu0
  %v351 = vadd.f32 %v70, %v350
  %352 = vmatmul.bf16.gmra.mxu0 %v134
  %v353 = vpop.f32.mrf.mxu0
  %v354 = vadd.f32 %v70, %v353
  %v355 = vpop.f32.mrf.mxu0
  %v356 = vadd.f32 %v70, %v355
  %357 = vmatmul.bf16.gmra.mxu0 %v136
  %v358 = vpop.f32.mrf.mxu0
  %v359 = vadd.f32 %v70, %v358
  %v360 = vpop.f32.mrf.mxu0
  %v361 = vadd.f32 %v70, %v360
  %362 = vdwg.mxu0
  %363 = vmatpush.bf16.msra.mxu0 %v280
  %364 = vmatpush.bf16.msra.mxu0 %v278
  %365 = vmatpush.bf16.msra.mxu0 %v276
  %366 = vmatpush.bf16.msra.mxu0 %v274
  %367 = vmatpush.bf16.msra.mxu0 %v272
  %368 = vmatpush.bf16.msra.mxu0 %v270
  %369 = vmatpush.bf16.msra.mxu0 %v268
  %370 = vmatpush.bf16.msra.mxu0 %v266
  %371 = vmatmul.bf16.gmra.mxu0 %v123
  %v372 = vpop.f32.mrf.mxu0
  %v373 = vadd.f32 %v324, %v372
  %v374 = vpop.f32.mrf.mxu0
  %v375 = vadd.f32 %v326, %v374
  %376 = vmatmul.bf16.gmra.mxu0 %v125
  %v377 = vpop.f32.mrf.mxu0
  %v378 = vadd.f32 %v329, %v377
  %v379 = vpop.f32.mrf.mxu0
  %v380 = vadd.f32 %v331, %v379
  %381 = vmatmul.bf16.gmra.mxu0 %v127
  %v382 = vpop.f32.mrf.mxu0
  %v383 = vadd.f32 %v334, %v382
  %v384 = vpop.f32.mrf.mxu0
  %v385 = vadd.f32 %v336, %v384
  %386 = vmatmul.bf16.gmra.mxu0 %v129
  %v387 = vpop.f32.mrf.mxu0
  %v388 = vadd.f32 %v339, %v387
  %v389 = vpop.f32.mrf.mxu0
  %v390 = vadd.f32 %v341, %v389
  %391 = vmatmul.bf16.gmra.mxu0 %v131
  %v392 = vpop.f32.mrf.mxu0
  %v393 = vadd.f32 %v344, %v392
  %v394 = vpop.f32.mrf.mxu0
  %v395 = vadd.f32 %v346, %v394
  %396 = vmatmul.bf16.gmra.mxu0 %v133
  %v397 = vpop.f32.mrf.mxu0
  %v398 = vadd.f32 %v349, %v397
  %v399 = vpop.f32.mrf.mxu0
  %v400 = vadd.f32 %v351, %v399
  %401 = vmatmul.bf16.gmra.mxu0 %v135
  %v402 = vpop.f32.mrf.mxu0
  %v403 = vadd.f32 %v354, %v402
  %v404 = vpop.f32.mrf.mxu0
  %v405 = vadd.f32 %v356, %v404
  %406 = vmatmul.bf16.gmra.mxu0 %v137
  %v407 = vpop.f32.mrf.mxu0
  %v408 = vadd.f32 %v359, %v407
  %v409 = vpop.f32.mrf.mxu0
  %v410 = vadd.f32 %v361, %v409
  %411 = vdwg.mxu0
  %412 = vmatpush.bf16.msra.mxu0 %v265
  %413 = vmatpush.bf16.msra.mxu0 %v263
  %414 = vmatpush.bf16.msra.mxu0 %v261
  %415 = vmatpush.bf16.msra.mxu0 %v259
  %416 = vmatpush.bf16.msra.mxu0 %v257
  %417 = vmatpush.bf16.msra.mxu0 %v255
  %418 = vmatpush.bf16.msra.mxu0 %v253
  %419 = vmatpush.bf16.msra.mxu0 %v251
  %420 = vmatmul.bf16.gmra.mxu0 %v122
  %v421 = vpop.f32.mrf.mxu0
  %v422 = vadd.f32 %v71, %v421
  %v423 = vpop.f32.mrf.mxu0
  %v424 = vadd.f32 %v71, %v423
  %425 = vmatmul.bf16.gmra.mxu0 %v124
  %v426 = vpop.f32.mrf.mxu0
  %v427 = vadd.f32 %v71, %v426
  %v428 = vpop.f32.mrf.mxu0
  %v429 = vadd.f32 %v71, %v428
  %430 = vmatmul.bf16.gmra.mxu0 %v126
  %v431 = vpop.f32.mrf.mxu0
  %v432 = vadd.f32 %v71, %v431
  %v433 = vpop.f32.mrf.mxu0
  %v434 = vadd.f32 %v71, %v433
  %435 = vmatmul.bf16.gmra.mxu0 %v128
  %v436 = vpop.f32.mrf.mxu0
  %v437 = vadd.f32 %v71, %v436
  %v438 = vpop.f32.mrf.mxu0
  %v439 = vadd.f32 %v71, %v438
  %440 = vmatmul.bf16.gmra.mxu0 %v130
  %v441 = vpop.f32.mrf.mxu0
  %v442 = vadd.f32 %v71, %v441
  %v443 = vpop.f32.mrf.mxu0
  %v444 = vadd.f32 %v71, %v443
  %445 = vmatmul.bf16.gmra.mxu0 %v132
  %v446 = vpop.f32.mrf.mxu0
  %v447 = vadd.f32 %v71, %v446
  %v448 = vpop.f32.mrf.mxu0
  %v449 = vadd.f32 %v71, %v448
  %450 = vmatmul.bf16.gmra.mxu0 %v134
  %v451 = vpop.f32.mrf.mxu0
  %v452 = vadd.f32 %v71, %v451
  %v453 = vpop.f32.mrf.mxu0
  %v454 = vadd.f32 %v71, %v453
  %455 = vmatmul.bf16.gmra.mxu0 %v136
  %v456 = vpop.f32.mrf.mxu0
  %v457 = vadd.f32 %v71, %v456
  %v458 = vpop.f32.mrf.mxu0
  %v459 = vadd.f32 %v71, %v458
  %460 = vdwg.mxu0
  %461 = vmatpush.bf16.msra.mxu0 %v281
  %462 = vmatpush.bf16.msra.mxu0 %v279
  %463 = vmatpush.bf16.msra.mxu0 %v277
  %464 = vmatpush.bf16.msra.mxu0 %v275
  %465 = vmatpush.bf16.msra.mxu0 %v273
  %466 = vmatpush.bf16.msra.mxu0 %v271
  %467 = vmatpush.bf16.msra.mxu0 %v269
  %468 = vmatpush.bf16.msra.mxu0 %v267
  %469 = vmatmul.bf16.gmra.mxu0 %v123
  %v470 = vpop.f32.mrf.mxu0
  %v471 = vadd.f32 %v422, %v470
  %v472 = vpop.f32.mrf.mxu0
  %v473 = vadd.f32 %v424, %v472
  %474 = vmatmul.bf16.gmra.mxu0 %v125
  %v475 = vpop.f32.mrf.mxu0
  %v476 = vadd.f32 %v427, %v475
  %v477 = vpop.f32.mrf.mxu0
  %v478 = vadd.f32 %v429, %v477
  %479 = vmatmul.bf16.gmra.mxu0 %v127
  %v480 = vpop.f32.mrf.mxu0
  %v481 = vadd.f32 %v432, %v480
  %v482 = vpop.f32.mrf.mxu0
  %v483 = vadd.f32 %v434, %v482
  %484 = vmatmul.bf16.gmra.mxu0 %v129
  %v485 = vpop.f32.mrf.mxu0
  %v486 = vadd.f32 %v437, %v485
  %v487 = vpop.f32.mrf.mxu0
  %v488 = vadd.f32 %v439, %v487
  %489 = vmatmul.bf16.gmra.mxu0 %v131
  %v490 = vpop.f32.mrf.mxu0
  %v491 = vadd.f32 %v442, %v490
  %v492 = vpop.f32.mrf.mxu0
  %v493 = vadd.f32 %v444, %v492
  %494 = vmatmul.bf16.gmra.mxu0 %v133
  %v495 = vpop.f32.mrf.mxu0
  %v496 = vadd.f32 %v447, %v495
  %v497 = vpop.f32.mrf.mxu0
  %v498 = vadd.f32 %v449, %v497
  %499 = vmatmul.bf16.gmra.mxu0 %v135
  %v500 = vpop.f32.mrf.mxu0
  %v501 = vadd.f32 %v452, %v500
  %v502 = vpop.f32.mrf.mxu0
  %v503 = vadd.f32 %v454, %v502
  %504 = vmatmul.bf16.gmra.mxu0 %v137
  %v505 = vpop.f32.mrf.mxu0
  %v506 = vadd.f32 %v457, %v505
  %v507 = vpop.f32.mrf.mxu0
  %v508 = vadd.f32 %v459, %v507
  %509 = vdwg.mxu0
  %v510 = vmax.f32 %v373, 0.0
  %v511 = vmax.f32 %v471, 0.0
  %v512 = vmax.f32 %v375, 0.0
  %v513 = vmax.f32 %v473, 0.0
  %v514 = vmax.f32 %v378, 0.0
  %v515 = vmax.f32 %v476, 0.0
  %v516 = vmax.f32 %v380, 0.0
  %v517 = vmax.f32 %v478, 0.0
  %v518 = vmax.f32 %v383, 0.0
  %v519 = vmax.f32 %v481, 0.0
  %v520 = vmax.f32 %v385, 0.0
  %v521 = vmax.f32 %v483, 0.0
  %v522 = vmax.f32 %v388, 0.0
  %v523 = vmax.f32 %v486, 0.0
  %v524 = vmax.f32 %v390, 0.0
  %v525 = vmax.f32 %v488, 0.0
  %v526 = vmax.f32 %v393, 0.0
  %v527 = vmax.f32 %v491, 0.0
  %v528 = vmax.f32 %v395, 0.0
  %v529 = vmax.f32 %v493, 0.0
  %v530 = vmax.f32 %v398, 0.0
  %v531 = vmax.f32 %v496, 0.0
  %v532 = vmax.f32 %v400, 0.0
  %v533 = vmax.f32 %v498, 0.0
  %v534 = vmax.f32 %v403, 0.0
  %v535 = vmax.f32 %v501, 0.0
  %v536 = vmax.f32 %v405, 0.0
  %v537 = vmax.f32 %v503, 0.0
  %v538 = vmax.f32 %v408, 0.0
  %v539 = vmax.f32 %v506, 0.0
  %v540 = vmax.f32 %v410, 0.0
  %v541 = vmax.f32 %v508, 0.0
  %v542 = vadd.f32 %v510, %v512
  %v543 = vrot.slane %v542, 4
  %v544 = vadd.f32 %v542, %v543
  %v545 = vrot.slane %v544, 2
  %v546 = vadd.f32 %v544, %v545
  %v547 = vrot.slane %v546, 1
  %v548 = vadd.f32 %v546, %v547
  %v549 = vadd.f32 %v511, %v513
  %v550 = vrot.slane %v549, 4
  %v551 = vadd.f32 %v549, %v550
  %v552 = vrot.slane %v551, 2
  %v553 = vadd.f32 %v551, %v552
  %v554 = vrot.slane %v553, 1
  %v555 = vadd.f32 %v553, %v554
  %v556 = vadd.f32 %v514, %v516
  %v557 = vrot.slane %v556, 4
  %v558 = vadd.f32 %v556, %v557
  %v559 = vrot.slane %v558, 2
  %v560 = vadd.f32 %v558, %v559
  %v561 = vrot.slane %v560, 1
  %v562 = vadd.f32 %v560, %v561
  %v563 = vadd.f32 %v515, %v517
  %v564 = vrot.slane %v563, 4
  %v565 = vadd.f32 %v563, %v564
  %v566 = vrot.slane %v565, 2
  %v567 = vadd.f32 %v565, %v566
  %v568 = vrot.slane %v567, 1
  %v569 = vadd.f32 %v567, %v568
  %v570 = vadd.f32 %v518, %v520
  %v571 = vrot.slane %v570, 4
  %v572 = vadd.f32 %v570, %v571
  %v573 = vrot.slane %v572, 2
  %v574 = vadd.f32 %v572, %v573
  %v575 = vrot.slane %v574, 1
  %v576 = vadd.f32 %v574, %v575
  %v577 = vadd.f32 %v519, %v521
  %v578 = vrot.slane %v577, 4
  %v579 = vadd.f32 %v577, %v578
  %v580 = vrot.slane %v579, 2
  %v581 = vadd.f32 %v579, %v580
  %v582 = vrot.slane %v581, 1
  %v583 = vadd.f32 %v581, %v582
  %v584 = vadd.f32 %v522, %v524
  %v585 = vrot.slane %v584, 4
  %v586 = vadd.f32 %v584, %v585
  %v587 = vrot.slane %v586, 2
  %v588 = vadd.f32 %v586, %v587
  %v589 = vrot.slane %v588, 1
  %v590 = vadd.f32 %v588, %v589
  %v591 = vadd.f32 %v523, %v525
  %v592 = vrot.slane %v591, 4
  %v593 = vadd.f32 %v591, %v592
  %v594 = vrot.slane %v593, 2
  %v595 = vadd.f32 %v593, %v594
  %v596 = vrot.slane %v595, 1
  %v597 = vadd.f32 %v595, %v596
  %v598 = vadd.f32 %v526, %v528
  %v599 = vrot.slane %v598, 4
  %v600 = vadd.f32 %v598, %v599
  %v601 = vrot.slane %v600, 2
  %v602 = vadd.f32 %v600, %v601
  %v603 = vrot.slane %v602, 1
  %v604 = vadd.f32 %v602, %v603
  %v605 = vadd.f32 %v527, %v529
  %v606 = vrot.slane %v605, 4
  %v607 = vadd.f32 %v605, %v606
  %v608 = vrot.slane %v607, 2
  %v609 = vadd.f32 %v607, %v608
  %v610 = vrot.slane %v609, 1
  %v611 = vadd.f32 %v609, %v610
  %v612 = vadd.f32 %v530, %v532
  %v613 = vrot.slane %v612, 4
  %v614 = vadd.f32 %v612, %v613
  %v615 = vrot.slane %v614, 2
  %v616 = vadd.f32 %v614, %v615
  %v617 = vrot.slane %v616, 1
  %v618 = vadd.f32 %v616, %v617
  %v619 = vadd.f32 %v531, %v533
  %v620 = vrot.slane %v619, 4
  %v621 = vadd.f32 %v619, %v620
  %v622 = vrot.slane %v621, 2
  %v623 = vadd.f32 %v621, %v622
  %v624 = vrot.slane %v623, 1
  %v625 = vadd.f32 %v623, %v624
  %v626 = vadd.f32 %v534, %v536
  %v627 = vrot.slane %v626, 4
  %v628 = vadd.f32 %v626, %v627
  %v629 = vrot.slane %v628, 2
  %v630 = vadd.f32 %v628, %v629
  %v631 = vrot.slane %v630, 1
  %v632 = vadd.f32 %v630, %v631
  %v633 = vadd.f32 %v535, %v537
  %v634 = vrot.slane %v633, 4
  %v635 = vadd.f32 %v633, %v634
  %v636 = vrot.slane %v635, 2
  %v637 = vadd.f32 %v635, %v636
  %v638 = vrot.slane %v637, 1
  %v639 = vadd.f32 %v637, %v638
  %v640 = vadd.f32 %v538, %v540
  %v641 = vrot.slane %v640, 4
  %v642 = vadd.f32 %v640, %v641
  %v643 = vrot.slane %v642, 2
  %v644 = vadd.f32 %v642, %v643
  %v645 = vrot.slane %v644, 1
  %v646 = vadd.f32 %v644, %v645
  %v647 = vadd.f32 %v539, %v541
  %v648 = vrot.slane %v647, 4
  %v649 = vadd.f32 %v647, %v648
  %v650 = vrot.slane %v649, 2
  %v651 = vadd.f32 %v649, %v650
  %v652 = vrot.slane %v651, 1
  %v653 = vadd.f32 %v651, %v652
  %v654 = vld [vmem:[%s3] sm:$0xff]
  %v655 = vld [vmem:[%s3 + $0x8] sm:$0xff]
  %v656 = vld [vmem:[%s3 + $0x10] sm:$0xff]
  %v657 = vld [vmem:[%s3 + $0x18] sm:$0xff]
  %v658 = vld [vmem:[%s3 + $0x20] sm:$0xff]
  %v659 = vld [vmem:[%s3 + $0x28] sm:$0xff]
  %v660 = vld [vmem:[%s3 + $0x30] sm:$0xff]
  %v661 = vld [vmem:[%s3 + $0x38] sm:$0xff]
  %v662 = vld [vmem:[%s3 + $0x40] sm:$0xff]
  %v663 = vld [vmem:[%s3 + $0x48] sm:$0xff]
  %v664 = vld [vmem:[%s3 + $0x50] sm:$0xff]
  %v665 = vld [vmem:[%s3 + $0x58] sm:$0xff]
  %v666 = vld [vmem:[%s3 + $0x60] sm:$0xff]
  %v667 = vld [vmem:[%s3 + $0x68] sm:$0xff]
  %v668 = vld [vmem:[%s3 + $0x70] sm:$0xff]
  %v669 = vld [vmem:[%s3 + $0x78] sm:$0xff]
  %v670 = vld [vmem:[%s3 + $0x80] sm:$0xff]
  %v671 = vld [vmem:[%s3 + $0x88] sm:$0xff]
  %v672 = vld [vmem:[%s3 + $0x90] sm:$0xff]
  %v673 = vld [vmem:[%s3 + $0x98] sm:$0xff]
  %v674 = vld [vmem:[%s3 + $0xa0] sm:$0xff]
  %v675 = vld [vmem:[%s3 + $0xa8] sm:$0xff]
  %v676 = vld [vmem:[%s3 + $0xb0] sm:$0xff]
  %v677 = vld [vmem:[%s3 + $0xb8] sm:$0xff]
  %v678 = vld [vmem:[%s3 + $0xc0] sm:$0xff]
  %v679 = vld [vmem:[%s3 + $0xc8] sm:$0xff]
  %v680 = vld [vmem:[%s3 + $0xd0] sm:$0xff]
  %v681 = vld [vmem:[%s3 + $0xd8] sm:$0xff]
  %v682 = vld [vmem:[%s3 + $0xe0] sm:$0xff]
  %v683 = vld [vmem:[%s3 + $0xe8] sm:$0xff]
  %v684 = vld [vmem:[%s3 + $0xf0] sm:$0xff]
  %v685 = vld [vmem:[%s3 + $0xf8] sm:$0xff]
  %v686 = vld [vmem:[%s4] sm:$0x1]
  %v688 = vperm.slane %v686, 0
  %vm706 = vcmask 1041409
  %v707 = vsel %vm706, %v562, %v548
  %vm708 = vcmask 1042434
  %v709 = vsel %vm708, %v576, %v707
  %vm710 = vcmask 1043459
  %v711 = vsel %vm710, %v590, %v709
  %vm712 = vcmask 1044484
  %v713 = vsel %vm712, %v604, %v711
  %vm714 = vcmask 1045509
  %v715 = vsel %vm714, %v618, %v713
  %vm716 = vcmask 1046534
  %v717 = vsel %vm716, %v632, %v715
  %vm718 = vcmask 1047559
  %v719 = vsel %vm718, %v646, %v717
  %v720 = vsel %vm706, %v569, %v555
  %v721 = vsel %vm708, %v583, %v720
  %v722 = vsel %vm710, %v597, %v721
  %v723 = vsel %vm712, %v611, %v722
  %v724 = vsel %vm714, %v625, %v723
  %v725 = vsel %vm716, %v639, %v724
  %v726 = vsel %vm718, %v653, %v725
  %729 = vmatpush.msra.mxu0 %v669
  %730 = vmatpush.msra.mxu0 %v668
  %731 = vmatpush.msra.mxu0 %v667
  %732 = vmatpush.msra.mxu0 %v666
  %733 = vmatpush.msra.mxu0 %v665
  %734 = vmatpush.msra.mxu0 %v664
  %735 = vmatpush.msra.mxu0 %v663
  %736 = vmatpush.msra.mxu0 %v662
  %737 = vmatpush.msra.mxu0 %v661
  %738 = vmatpush.msra.mxu0 %v660
  %739 = vmatpush.msra.mxu0 %v659
  %740 = vmatpush.msra.mxu0 %v658
  %741 = vmatpush.msra.mxu0 %v657
  %742 = vmatpush.msra.mxu0 %v656
  %743 = vmatpush.msra.mxu0 %v655
  %744 = vmatpush.msra.mxu0 %v654
  %745 = vmatmul.f32.gmra.mxu0 %v719
  %v746 = vpop.f32.mrf.mxu0
  %v747 = vadd.f32 %v688, %v746
  %748 = vdwg.mxu0
  %749 = vmatpush.msra.mxu0 %v685
  %750 = vmatpush.msra.mxu0 %v684
  %751 = vmatpush.msra.mxu0 %v683
  %752 = vmatpush.msra.mxu0 %v682
  %753 = vmatpush.msra.mxu0 %v681
  %754 = vmatpush.msra.mxu0 %v680
  %755 = vmatpush.msra.mxu0 %v679
  %756 = vmatpush.msra.mxu0 %v678
  %757 = vmatpush.msra.mxu0 %v677
  %758 = vmatpush.msra.mxu0 %v676
  %759 = vmatpush.msra.mxu0 %v675
  %760 = vmatpush.msra.mxu0 %v674
  %761 = vmatpush.msra.mxu0 %v673
  %762 = vmatpush.msra.mxu0 %v672
  %763 = vmatpush.msra.mxu0 %v671
  %764 = vmatpush.msra.mxu0 %v670
  %765 = vmatmul.f32.gmra.mxu0 %v726
  %v766 = vpop.f32.mrf.mxu0
  %v767 = vadd.f32 %v747, %v766
  %768 = vdwg.mxu0
  %v769 = vmax.f32 %v767, 0.0
  %vm770 = vcmask 261120
  %771 = vst.msk [vmem:[%s5] sm:$0xff] %vm770, %v769
  // Predicated region
  $region22: #{backbone_forward.1} parent=0 // pred_check
    _
  $region23: #{backbone_forward.1} parent=0 // pred_check_branch
    %773 = sbr.rel (0) target = $region25
  $region24: #{backbone_forward.1} parent=0 // pred_region
    _
  $region25: #{backbone_forward.1} parent=0 // pred_fallthru
    _
  // Predicated region
  $region26: #{backbone_forward.1} parent=0 // pred_check
    _
  $region27: #{backbone_forward.1} parent=0 // pred_check_branch
    %775 = sbr.rel (0) target = $region29
  $region28: #{backbone_forward.1} parent=0 // pred_region
    _
  $region29: #{backbone_forward.1} parent=0 // pred_fallthru
    _

</llo_original>
